<compile_context>
chip_gen: v5e
topology: v5e:2x2
jax: 0.10.0
libtpu: 0.0.40
codegen_flags: <defaults>
</compile_context>

<pallas_src>
import jax
import jax.numpy as jnp
from jax import lax
from jax.experimental import pallas as pl
from jax.experimental.pallas import tpu as pltpu

_LANES = 128
_SUBLANES = 8
_VREG = _SUBLANES * _LANES  # 1024 f32 elements


def _round_up(x: int, m: int) -> int:
    return ((x + m - 1) // m) * m


def _round_down(x: int, m: int) -> int:
    return (x // m) * m


def _chip_defaults():
    """(block_rows, num_partitions, use_core_parallel) per TPU generation."""
    kind = ""
    try:
        kind = (jax.devices()[0].device_kind or "").lower()
    except Exception:
        pass
    if "v7" in kind or "tpu7" in kind:
        # 2 TensorCores per chip; 4 MiB tiles keep double-buffered inputs at
        # ~16 MiB, under the 32 MiB scoped-VMEM default (64 MiB physical/TC).
        return 8192, 2, True
    if "v6" in kind:
        # Single TC, 1.4 TB/s HBM: 8 MiB per step amortizes the ~0.35us
        # per-grid-step overhead to a few percent; fits the 32 MiB default.
        return 8192, 1, False
    # v5e and unknown chips: stay well inside the 16 MiB scoped-VMEM default.
    return 4096, 1, False


def rmse_loss(yhat: jax.Array, y: jax.Array, *, block_rows: int | None = None,
              num_partitions: int | None = None) -> jax.Array:
    """sqrt(mean((yhat - y)^2)) over all elements, via a Pallas TPU kernel."""
    assert yhat.shape == y.shape, "yhat and y must have identical shapes"
    n_total = yhat.size
    assert n_total > 0, "RMSE of an empty tensor is undefined"

    d_rows, d_parts, d_core_par = _chip_defaults()
    if block_rows is None:
        block_rows = d_rows
    if num_partitions is None:
        num_partitions = d_parts

    # ---- lane-dense (rows, 128) view, zero-copy when already 128-aligned ----
    yh = yhat.reshape(-1)
    yt = y.reshape(-1)
    if n_total < _VREG:
        n_arr = _VREG                       # tiny input: pad to one (8,128) tile
    else:
        n_arr = _round_up(n_total, _LANES)  # <128 zeros only when lane-ragged
    if n_arr != n_total:
        yh = jnp.pad(yh, (0, n_arr - n_total))
        yt = jnp.pad(yt, (0, n_arr - n_total))
    rows = n_arr // _LANES
    yh = yh.reshape(rows, _LANES)
    yt = yt.reshape(rows, _LANES)

    # ---- adaptive tile / partition geometry (all static Python ints) --------
    p = max(1, int(num_partitions))
    tr = min(block_rows,
             _round_up(pl.cdiv(rows, p), _SUBLANES),
             _round_down(rows, _SUBLANES))
    tr = max(tr, _SUBLANES)
    n_blocks = pl.cdiv(rows, tr)
    p = min(p, n_blocks)
    bpp = pl.cdiv(n_blocks, p)              # blocks per partition
    use_core_parallel = d_core_par and p > 1

    mask_needed = (rows % tr != 0) or (p * bpp != n_blocks)
    clamp_needed = (p * bpp != n_blocks)
    last_blk = n_blocks - 1

    if clamp_needed:
        # Overflow steps from partition rounding re-read the last block and
        # are fully masked in the kernel (at most p-1 wasted block reads).
        def in_index(i, s):
            return (jnp.minimum(i * bpp + s, last_blk), 0)
    else:
        def in_index(i, s):
            return (i * bpp + s, 0)

    def kernel(yh_ref, yt_ref, out_ref, acc_ref):
        s = pl.program_id(1)

        @pl.when(s == 0)
        def _():
            acc_ref[...] = jnp.zeros_like(acc_ref)

        d = yh_ref[...].astype(jnp.float32) - yt_ref[...].astype(jnp.float32)
        d2 = d * d
        if mask_needed:
            # Mask rows beyond the real array (ragged final block and/or
            # partition-rounding overflow blocks).  Static when not needed.
            blk = pl.program_id(0) * bpp + s
            rid = blk * tr + lax.broadcasted_iota(jnp.int32, (tr, _LANES), 0)
            d2 = jnp.where(rid < rows, d2, 0.0)
        # Fold the (tr, 128) tile into the resident (8, 128) accumulator with
        # pure vreg adds (group consecutive sublane-tiles; no cross-lane work).
        acc_ref[...] += jnp.sum(
            d2.reshape(tr // _SUBLANES, _SUBLANES, _LANES), axis=0)

        @pl.when(s == pl.num_programs(1) - 1)
        def _():
            out_ref[0] = acc_ref[...]

    dim_sem = ((pltpu.CORE_PARALLEL, pltpu.ARBITRARY) if use_core_parallel
               else ("parallel", "arbitrary"))

    partials = pl.pallas_call(
        kernel,
        out_shape=jax.ShapeDtypeStruct((p, _SUBLANES, _LANES), jnp.float32),
        grid_spec=pltpu.PrefetchScalarGridSpec(
            num_scalar_prefetch=0,
            grid=(p, bpp),
            in_specs=[
                pl.BlockSpec((tr, _LANES), in_index),
                pl.BlockSpec((tr, _LANES), in_index),
            ],
            out_specs=pl.BlockSpec((1, _SUBLANES, _LANES), lambda i, s: (i, 0, 0)),
            scratch_shapes=[pltpu.VMEM((_SUBLANES, _LANES), jnp.float32)],
        ),
        compiler_params=pltpu.CompilerParams(dimension_semantics=dim_sem),
    )(yh, yt)

    # Tiny final reduction + sqrt(mean) over the true (unpadded) element count.
    return jnp.sqrt(jnp.sum(partials) / jnp.float32(n_total))


if __name__ == "__main__":
    key = jax.random.PRNGKey(0)
    k1, k2, k3, k4, k5, k6 = jax.random.split(key, 6)

    # Primary small case consistent with an LSTM regression head:
    # batch=2, seq=8, hidden=32.
    shape = (2, 8, 32)
    yhat = jax.random.normal(k1, shape, dtype=jnp.float32)
    y = jax.random.normal(k2, shape, dtype=jnp.float32)
    loss = rmse_loss(yhat, y)
    jax.block_until_ready(loss)
    ref = jnp.sqrt(jnp.mean((yhat - y) ** 2))
    assert jnp.allclose(loss, ref, rtol=1e-5, atol=1e-6), (loss, ref)

    # Awkward, non lane-aligned shape (exercises the tiny-input pad path).
    shape2 = (3, 7, 33)
    yhat2 = jax.random.normal(k3, shape2, dtype=jnp.float32)
    y2 = jax.random.normal(k4, shape2, dtype=jnp.float32)
    loss2 = rmse_loss(yhat2, y2)
    jax.block_until_ready(loss2)
    ref2 = jnp.sqrt(jnp.mean((yhat2 - y2) ** 2))
    assert jnp.allclose(loss2, ref2, rtol=1e-5, atol=1e-6), (loss2, ref2)

    # Lane-aligned but row-ragged case: 131,584 elements = 1028 rows of 128.
    # Zero-copy path; small block_rows forces multiple grid steps plus an
    # in-kernel masked final block.
    shape3 = (4, 128, 257)
    yhat3 = jax.random.normal(k5, shape3, dtype=jnp.float32)
    y3 = jax.random.normal(k6, shape3, dtype=jnp.float32)
    loss3 = rmse_loss(yhat3, y3, block_rows=512)
    jax.block_until_ready(loss3)
    ref3 = jnp.sqrt(jnp.mean((yhat3 - y3) ** 2))
    assert jnp.allclose(loss3, ref3, rtol=1e-4, atol=1e-6), (loss3, ref3)

    # bf16 inputs stay bf16 end-to-end (halves HBM reads); accumulation is f32.
    yhat4 = yhat.astype(jnp.bfloat16)
    y4 = y.astype(jnp.bfloat16)
    loss4 = rmse_loss(yhat4, y4)
    jax.block_until_ready(loss4)
    ref4 = jnp.sqrt(jnp.mean(
        (yhat4.astype(jnp.float32) - y4.astype(jnp.float32)) ** 2))
    assert jnp.allclose(loss4, ref4, rtol=1e-4, atol=1e-6), (loss4, ref4)

    print("KERNEL_OK")
</pallas_src>

<mosaic_0001>
module attributes {stable_mosaic.version = 11 : i64} {
  func.func @kernel(%arg0: i32, %arg1: i32, %arg2: memref<8x128xf32, #tpu.memory_space<vmem>>, %arg3: memref<8x128xf32, #tpu.memory_space<vmem>>, %arg4: memref<1x8x128xf32, #tpu.memory_space<vmem>>, %arg5: memref<8x128xf32, #tpu.memory_space<vmem>>) attributes {dimension_semantics = [#tpu.dimension_semantics<parallel>, #tpu.dimension_semantics<arbitrary>], iteration_bounds = array<i64: 1, 1>, scalar_prefetch = 0 : i64, scratch_operands = 1 : i64, tpu.core_type = #tpu.core_type<tc>, window_params = [{transform_indices = @transform_0, window_bounds = array<i64: 8, 128>}, {transform_indices = @transform_1, window_bounds = array<i64: 8, 128>}, {transform_indices = @transform_2, window_bounds = array<i64: 1, 8, 128>}]} {
    %c0_i32 = arith.constant 0 : i32
    %0 = arith.cmpi eq, %arg1, %c0_i32 : i32
    %1 = arith.extui %0 : i1 to i32
    %c0_i32_0 = arith.constant 0 : i32
    %2 = arith.cmpi ne, %1, %c0_i32_0 : i32
    scf.if %2 {
      %cst_10 = arith.constant 0.000000e+00 : f32
      %15 = vector.broadcast %cst_10 : f32 to vector<8x128xf32>
      %c0_11 = arith.constant 0 : index
      %c0_12 = arith.constant 0 : index
      %16 = vector.load %arg5[%c0_11, %c0_12] : memref<8x128xf32, #tpu.memory_space<vmem>>, vector<8x128xf32>
      tpu.vector_store %arg5[%c0_11, %c0_12], %15 {strides = array<i32>} : memref<8x128xf32, #tpu.memory_space<vmem>>, vector<8x128xf32>,
    } else {
    }
    %c0 = arith.constant 0 : index
    %c0_1 = arith.constant 0 : index
    %3 = vector.load %arg2[%c0, %c0_1] : memref<8x128xf32, #tpu.memory_space<vmem>>, vector<8x128xf32>
    %c0_2 = arith.constant 0 : index
    %c0_3 = arith.constant 0 : index
    %4 = vector.load %arg3[%c0_2, %c0_3] : memref<8x128xf32, #tpu.memory_space<vmem>>, vector<8x128xf32>
    %5 = arith.subf %3, %4 : vector<8x128xf32>
    %6 = arith.mulf %5, %5 : vector<8x128xf32>
    %c0_4 = arith.constant 0 : index
    %c0_5 = arith.constant 0 : index
    %7 = vector.load %arg5[%c0_4, %c0_5] : memref<8x128xf32, #tpu.memory_space<vmem>>, vector<8x128xf32>
    %8 = vector.shape_cast %6 : vector<8x128xf32> to vector<1x8x128xf32>
    %cst = arith.constant dense<0.000000e+00> : vector<8x128xf32>
    %9 = vector.multi_reduction <add>, %8, %cst [0] : vector<1x8x128xf32> to vector<8x128xf32>
    %10 = arith.addf %7, %9 : vector<8x128xf32>
    %c0_6 = arith.constant 0 : index
    %c0_7 = arith.constant 0 : index
    %11 = vector.load %arg5[%c0_6, %c0_7] : memref<8x128xf32, #tpu.memory_space<vmem>>, vector<8x128xf32>
    tpu.vector_store %arg5[%c0_6, %c0_7], %10 {strides = array<i32>} : memref<8x128xf32, #tpu.memory_space<vmem>>, vector<8x128xf32>,
    %c0_i32_8 = arith.constant 0 : i32
    %12 = arith.cmpi eq, %arg1, %c0_i32_8 : i32
    %13 = arith.extui %12 : i1 to i32
    %c0_i32_9 = arith.constant 0 : i32
    %14 = arith.cmpi ne, %13, %c0_i32_9 : i32
    scf.if %14 {
      %c0_10 = arith.constant 0 : index
      %c0_11 = arith.constant 0 : index
      %15 = vector.load %arg5[%c0_10, %c0_11] : memref<8x128xf32, #tpu.memory_space<vmem>>, vector<8x128xf32>
      %c0_12 = arith.constant 0 : index
      %c0_13 = arith.constant 0 : index
      %c0_14 = arith.constant 0 : index
      %16 = vector.load %arg4[%c0_12, %c0_13, %c0_14] : memref<1x8x128xf32, #tpu.memory_space<vmem>>, vector<1x8x128xf32>
      %17 = vector.shape_cast %16 : vector<1x8x128xf32> to vector<8x128xf32>
      %18 = vector.shape_cast %15 : vector<8x128xf32> to vector<1x8x128xf32>
      tpu.vector_store %arg4[%c0_12, %c0_13, %c0_14], %18 {strides = array<i32>} : memref<1x8x128xf32, #tpu.memory_space<vmem>>, vector<1x8x128xf32>,
    } else {
    }
    return
  }
  func.func @transform_0(%arg0: i32, %arg1: i32) -> (i32, i32) {
    %c1_i32 = arith.constant 1 : i32
    %0 = arith.muli %arg0, %c1_i32 : i32
    %1 = arith.addi %0, %arg1 : i32
    %c0_i32 = arith.constant 0 : i32
    %c0_i32_0 = arith.constant 0 : i32
    return %1, %c0_i32 : i32, i32
  }
  func.func @transform_1(%arg0: i32, %arg1: i32) -> (i32, i32) {
    %c1_i32 = arith.constant 1 : i32
    %0 = arith.muli %arg0, %c1_i32 : i32
    %1 = arith.addi %0, %arg1 : i32
    %c0_i32 = arith.constant 0 : i32
    %c0_i32_0 = arith.constant 0 : i32
    return %1, %c0_i32 : i32, i32
  }
  func.func @transform_2(%arg0: i32, %arg1: i32) -> (i32, i32, i32) {
    %c0_i32 = arith.constant 0 : i32
    %c0_i32_0 = arith.constant 0 : i32
    %c0_i32_1 = arith.constant 0 : i32
    return %arg0, %c0_i32, %c0_i32_0 : i32, i32, i32
  }
}

</mosaic_0001>

<llo_original>
// kernel: tpu_custom_call.1
$region0: #{tpu_custom_call.1}
  #allocation0 [shape = 'u32[]', space=smem, size = 0x4, offset = 0x4, fixed_abs, tag = 'smem constant byte address 0x4 - core index']
  #allocation1 [shape = 'u32[72,128]{1,0:T(1,128)}', space=vmem, size = 0x9000, scoped, tag = 'internal scratch']
  #allocation2 [shape = 'f32[8,128]{1,0:T(8,128)}', space=vmem, size = 0x1000, scoped, tag = 'scratch operand']
  %s0 = inlined_call_operand.hbm [shape: f32[8,128], index: 0, kind: input, shape index: {}]
  %s1 = inlined_call_operand.hbm [shape: f32[8,128], index: 1, kind: input, shape index: {}]
  %s2 = inlined_call_operand.hbm [shape: f32[1,8,128], index: 2, kind: output, shape index: {}]
  %s3 = sld [smem:[#allocation0]]
  $region34: #{tpu_custom_call.1} parent=0
    _
  %s5 = ssub.s32 1, %s3
  %s6 = scalar_select 0, %s5, %s3
  $region1: #{tpu_custom_call.1} parent=0
    #allocation3 [shape = 'u8[4096]{0}', space=vmem, size = 0x1000, scoped, tag = 'input window, operand 0, single buffered']
    #allocation4 [shape = 's32[1]{0}', space=sflag, size = 0x4, scoped, tag = 'scoped memory for tpu_custom_call.1']
    #allocation5 [shape = 's32[1]{0}', space=sflag, size = 0x4, scoped, tag = 'scoped memory for tpu_custom_call.1']
    #allocation6 [shape = 'u8[4096]{0}', space=vmem, size = 0x1000, scoped, tag = 'input window, operand 1, single buffered']
    #allocation7 [shape = 's32[1]{0}', space=sflag, size = 0x4, scoped, tag = 'scoped memory for tpu_custom_call.1']
    #allocation8 [shape = 'u8[4096]{0}', space=vmem, size = 0x1000, scoped, tag = 'output window, operand 0, single buffered']
    %7 = vsyncpa [#allocation4], 0
    %8 = vsyncpa [#allocation7], 0
    %9 = vsyncpa [#allocation5], 0
    // Predicated region
    $region2: #{tpu_custom_call.1} parent=1 // pred_check
      _
    $region3: #{tpu_custom_call.1} parent=1 // pred_check_branch
      %11 = sbr.rel (0) target = $region5
    $region4: #{tpu_custom_call.1} parent=1 // pred_region
      %s12 = sadd.s32 0, 0
      %14 = vsyncadd [#allocation4], 0
      %s15 = smul.addr %s12, 8
      %s16 = scalar_lea.hbm %s0, %s15
      %s18 = sshll.u32 %s16, 4
      %s19 = int_to_ptr.hbm [resolvable:$true] %s18
      %s20 = sshll.u32 [#allocation3], 4
      %s21 = int_to_ptr.vmem [resolvable:$true] %s20
      %23 = dma.hbm_to_vmem [thread:$0]  %s19, 128, %s21, [#allocation4]
    $region5: #{tpu_custom_call.1} parent=1 // pred_fallthru
      _
    // Predicated region
    $region6: #{tpu_custom_call.1} parent=1 // pred_check
      _
    $region7: #{tpu_custom_call.1} parent=1 // pred_check_branch
      %25 = sbr.rel (0) target = $region9
    $region8: #{tpu_custom_call.1} parent=1 // pred_region
      %s26 = sadd.s32 0, 0
      %28 = vsyncadd [#allocation7], 0
      %s29 = smul.addr %s26, 8
      %s30 = scalar_lea.hbm %s1, %s29
      %s32 = sshll.u32 %s30, 4
      %s33 = int_to_ptr.hbm [resolvable:$true] %s32
      %s34 = sshll.u32 [#allocation6], 4
      %s35 = int_to_ptr.vmem [resolvable:$true] %s34
      %37 = dma.hbm_to_vmem [thread:$0]  %s33, 128, %s35, [#allocation7]
    $region9: #{tpu_custom_call.1} parent=1 // pred_fallthru
      _
    // Predicated region
    $region10: #{tpu_custom_call.1} parent=1 // pred_check
      _
    $region11: #{tpu_custom_call.1} parent=1 // pred_check_branch
      %39 = sbr.rel (0) target = $region13
    $region12: #{tpu_custom_call.1} parent=1 // pred_region
      %41 = dma.done [#allocation4], 128
    $region13: #{tpu_custom_call.1} parent=1 // pred_fallthru
      _
    // Predicated region
    $region14: #{tpu_custom_call.1} parent=1 // pred_check
      _
    $region15: #{tpu_custom_call.1} parent=1 // pred_check_branch
      %43 = sbr.rel (0) target = $region17
    $region16: #{tpu_custom_call.1} parent=1 // pred_region
      %45 = dma.done [#allocation7], 128
    $region17: #{tpu_custom_call.1} parent=1 // pred_fallthru
      _
    %s46 = sadd.s32 0, 0
    %s47 = sadd.s32 0, 0
    %p48 = scmp.eq.s32.totalorder 0, 0
    // Predicated region
    $region18: #{tpu_custom_call.1} parent=1 // pred_check
      %p49 = pneg %p48
    $region19: #{tpu_custom_call.1} parent=1 // pred_check_branch
      %51 = sbr.rel (%p49) target = $region21
    $region20: #{tpu_custom_call.1} parent=1 // pred_region
      %52 = vst [vmem:[#allocation2] sm:$0xff] 0.0
    $region21: #{tpu_custom_call.1} parent=1 // pred_fallthru
      _
    %v53 = vld [vmem:[#allocation3] sm:$0xff]
    %v54 = vld [vmem:[#allocation6] sm:$0xff]
    %v55 = vsub.f32 %v53, %v54
    %v56 = vmul.f32 %v55, %v55
    %v57 = vld [vmem:[#allocation2] sm:$0xff]
    %v58 = vadd.f32 %v56, 0.0
    %v59 = vadd.f32 %v57, %v58
    %60 = vst [vmem:[#allocation2] sm:$0xff] %v59
    // Predicated region
    $region22: #{tpu_custom_call.1} parent=1 // pred_check
      %p61 = pneg %p48
    $region23: #{tpu_custom_call.1} parent=1 // pred_check_branch
      %63 = sbr.rel (%p61) target = $region25
    $region24: #{tpu_custom_call.1} parent=1 // pred_region
      %v64 = vld [vmem:[#allocation2] sm:$0xff]
      %65 = vst [vmem:[#allocation8] sm:$0xff] %v64
    $region25: #{tpu_custom_call.1} parent=1 // pred_fallthru
      _
    // Predicated region
    $region26: #{tpu_custom_call.1} parent=1 // pred_check
      _
    $region27: #{tpu_custom_call.1} parent=1 // pred_check_branch
      %67 = sbr.rel (0) target = $region29
    $region28: #{tpu_custom_call.1} parent=1 // pred_region
      %69 = vsyncadd [#allocation5], 0
      %s71 = sshll.u32 [#allocation8], 4
      %s72 = int_to_ptr.vmem [resolvable:$true] %s71
      %s73 = sshll.u32 %s2, 4
      %s74 = int_to_ptr.hbm [resolvable:$true] %s73
      %76 = dma.vmem_to_hbm [thread:$0]  %s72, 128, %s74, [#allocation5]
    $region29: #{tpu_custom_call.1} parent=1 // pred_fallthru
      _
    // Predicated region
    $region30: #{tpu_custom_call.1} parent=1 // pred_check
      _
    $region31: #{tpu_custom_call.1} parent=1 // pred_check_branch
      %78 = sbr.rel (0) target = $region33
    $region32: #{tpu_custom_call.1} parent=1 // pred_region
      %80 = dma.done [#allocation5], 128
    $region33: #{tpu_custom_call.1} parent=1 // pred_fallthru
      _
    %81 = vsyncpa [#allocation4], 1
    %82 = vsyncpa [#allocation7], 1
    %83 = vsyncpa [#allocation5], 1

</llo_original>
